<compile_context>
chip_gen: v5e
topology: v5e:2x2
jax: 0.10.0
libtpu: 0.0.40
codegen_flags: <defaults>
</compile_context>

<pallas_src>
import jax
import jax.numpy as jnp
from jax.experimental import pallas as pl
from jax.experimental.pallas import tpu as pltpu


def _round_up(x, m):
    return ((x + m - 1) // m) * m


def mlp_kernel(x_ref, w1_ref, b1_ref, w2_ref, b2_ref, w3_ref, b3_ref, o_ref):
    """One batch tile. Batch stays on the lane (last) axis throughout so every
    intermediate and the output store are lane-dense."""
    # Layer 1: w1 [16,32] x x [TB,32], contracting both last dims -> [16, TB]
    h1 = jax.lax.dot_general(
        w1_ref[...], x_ref[...],
        dimension_numbers=(((1,), (1,)), ((), ())),
        preferred_element_type=jnp.float32)
    h1 = jnp.maximum(h1 + b1_ref[...], 0.0)          # bias [16,1] broadcasts over lanes

    # Layer 2: [4,16] @ [16,TB] -> [4, TB]
    h2 = jnp.dot(w2_ref[...], h1, preferred_element_type=jnp.float32)
    h2 = jnp.maximum(h2 + b2_ref[...], 0.0)

    # Layer 3 (Linear(4,1)): VPU weighted sum over the 4 feature rows -> [1, TB]
    y = jnp.sum(h2 * w3_ref[...], axis=0, keepdims=True) + b3_ref[...]

    # Output block is (1, 1, TILE_B): lane-dense full-width store.
    o_ref[0, :, :] = y.astype(o_ref.dtype)


def mymodel_forward(x, params):
    """x: any float array with batch dim first whose trailing dims flatten to 32."""
    B = x.shape[0]
    x2d = x.reshape(B, -1).astype(jnp.float32)        # nn.Flatten
    assert x2d.shape[1] == 32, "model expects 32 flattened features"
    w1, b1, w2, b2, w3, b3 = params                   # torch layout: w [out,in], b [out]

    # Kernel-side parameter shapes (biases as columns; w3 as a [4,1] column).
    b1c = b1.reshape(16, 1).astype(jnp.float32)
    b2c = b2.reshape(4, 1).astype(jnp.float32)
    w3c = w3.reshape(4, 1).astype(jnp.float32)
    b3c = b3.reshape(1, 1).astype(jnp.float32)
    w1f = w1.astype(jnp.float32)
    w2f = w2.astype(jnp.float32)

    # Batch tiling: large lane-aligned tiles; pad the tail tile with zeros.
    TILE_B_MAX = 4096
    tile_b = min(TILE_B_MAX, _round_up(max(B, 1), 128))
    num_tiles = pl.cdiv(B, tile_b)
    b_pad = num_tiles * tile_b
    if b_pad != B:
        x2d = jnp.pad(x2d, ((0, b_pad - B), (0, 0)))

    flops = 2 * b_pad * (32 * 16 + 16 * 4 + 4 * 1)
    weight_bytes = 4 * (16 * 32 + 16 + 4 * 16 + 4 + 4 + 1)
    bytes_accessed = b_pad * 32 * 4 + b_pad * 4 + weight_bytes

    out_rows = pl.pallas_call(
        mlp_kernel,
        out_shape=jax.ShapeDtypeStruct((num_tiles, 1, tile_b), jnp.float32),
        grid=(num_tiles,),
        in_specs=[
            pl.BlockSpec((tile_b, 32), lambda i: (i, 0)),   # x tile (pipelined)
            pl.BlockSpec((16, 32), lambda i: (0, 0)),       # w1 (VMEM-resident)
            pl.BlockSpec((16, 1), lambda i: (0, 0)),        # b1
            pl.BlockSpec((4, 16), lambda i: (0, 0)),        # w2
            pl.BlockSpec((4, 1), lambda i: (0, 0)),         # b2
            pl.BlockSpec((4, 1), lambda i: (0, 0)),         # w3
            pl.BlockSpec((1, 1), lambda i: (0, 0)),         # b3
        ],
        # Last two block dims equal the full array dims -> valid at any num_tiles.
        out_specs=pl.BlockSpec((1, 1, tile_b), lambda i: (i, 0, 0)),
        compiler_params=pltpu.CompilerParams(
            dimension_semantics=("parallel",)),
        cost_estimate=pl.CostEstimate(
            flops=flops, transcendentals=0, bytes_accessed=bytes_accessed),
    )(x2d, w1f, b1c, w2f, b2c, w3c, b3c)

    # (num_tiles, 1, tile_b) blocks are contiguous batch chunks -> flatten, crop.
    return out_rows.reshape(-1)[:B].reshape(B, 1)


def init_params(key):
    """PyTorch nn.Linear default init: U(+/- 1/sqrt(fan_in)); weights [out, in]."""
    def linear(key, fan_in, fan_out):
        kw, kb = jax.random.split(key)
        bound = 1.0 / jnp.sqrt(fan_in)
        w = jax.random.uniform(kw, (fan_out, fan_in), jnp.float32, -bound, bound)
        b = jax.random.uniform(kb, (fan_out,), jnp.float32, -bound, bound)
        return w, b

    k1, k2, k3 = jax.random.split(key, 3)
    w1, b1 = linear(k1, 32, 16)
    w2, b2 = linear(k2, 16, 4)
    w3, b3 = linear(k3, 4, 1)
    return (w1, b1, w2, b2, w3, b3)


if __name__ == "__main__":
    key = jax.random.PRNGKey(0)
    kx, kp = jax.random.split(key)

    # Small input consistent with the forward: batch=8, flattens to 32 features.
    x = jax.random.normal(kx, (8, 4, 8), jnp.float32)   # Flatten -> (8, 32)
    params = init_params(kp)

    y = mymodel_forward(x, params)
    jax.block_until_ready(y)

    # Pure-JAX reference of the same PyTorch math (w stored [out,in]).
    w1, b1, w2, b2, w3, b3 = params
    xf = x.reshape(8, -1)
    ref = jnp.maximum(xf @ w1.T + b1, 0.0)
    ref = jnp.maximum(ref @ w2.T + b2, 0.0)
    ref = ref @ w3.T + b3
    assert y.shape == (8, 1)
    assert jnp.allclose(y, ref, atol=1e-5, rtol=1e-5)

    print("KERNEL_OK")
</pallas_src>

<mosaic_0001>
module attributes {stable_mosaic.version = 11 : i64} {
  func.func @mlp_kernel(%arg0: i32, %arg1: memref<128x32xf32, #tpu.memory_space<vmem>>, %arg2: memref<16x32xf32, #tpu.memory_space<vmem>>, %arg3: memref<16x1xf32, #tpu.memory_space<vmem>>, %arg4: memref<4x16xf32, #tpu.memory_space<vmem>>, %arg5: memref<4x1xf32, #tpu.memory_space<vmem>>, %arg6: memref<4x1xf32, #tpu.memory_space<vmem>>, %arg7: memref<1x1xf32, #tpu.memory_space<vmem>>, %arg8: memref<1x1x128xf32, #tpu.memory_space<vmem>>) attributes {dimension_semantics = [#tpu.dimension_semantics<parallel>], iteration_bounds = array<i64: 1>, scalar_prefetch = 0 : i64, scratch_operands = 0 : i64, tpu.core_type = #tpu.core_type<tc>, window_params = [{transform_indices = @transform_0, window_bounds = array<i64: 128, 32>}, {pipeline_mode = #tpu.pipeline_mode<synchronous>, transform_indices = @transform_1, window_bounds = array<i64: 16, 32>}, {pipeline_mode = #tpu.pipeline_mode<synchronous>, transform_indices = @transform_2, window_bounds = array<i64: 16, 1>}, {pipeline_mode = #tpu.pipeline_mode<synchronous>, transform_indices = @transform_3, window_bounds = array<i64: 4, 16>}, {pipeline_mode = #tpu.pipeline_mode<synchronous>, transform_indices = @transform_4, window_bounds = array<i64: 4, 1>}, {pipeline_mode = #tpu.pipeline_mode<synchronous>, transform_indices = @transform_5, window_bounds = array<i64: 4, 1>}, {pipeline_mode = #tpu.pipeline_mode<synchronous>, transform_indices = @transform_6, window_bounds = array<i64: 1, 1>}, {transform_indices = @transform_7, window_bounds = array<i64: 1, 1, 128>}]} {
    %c0 = arith.constant 0 : index
    %c0_0 = arith.constant 0 : index
    %0 = vector.load %arg2[%c0, %c0_0] : memref<16x32xf32, #tpu.memory_space<vmem>>, vector<16x32xf32>
    %c0_1 = arith.constant 0 : index
    %c0_2 = arith.constant 0 : index
    %1 = vector.load %arg1[%c0_1, %c0_2] : memref<128x32xf32, #tpu.memory_space<vmem>>, vector<128x32xf32>
    %cst = arith.constant dense<0.000000e+00> : vector<16x128xf32>
    %2 = tpu.matmul %0, %1, %cst {dimension_numbers = #tpu.dot_dimension_numbers<[1], [1], [0], [0], [0, 0, 1, 0], [], []>} : vector<16x32xf32>, vector<128x32xf32>, vector<16x128xf32> -> vector<16x128xf32>
    %c0_3 = arith.constant 0 : index
    %c0_4 = arith.constant 0 : index
    %3 = vector.load %arg3[%c0_3, %c0_4] : memref<16x1xf32, #tpu.memory_space<vmem>>, vector<16x1xf32>
    %4 = vector.broadcast %3 : vector<16x1xf32> to vector<16x128xf32>
    %5 = arith.addf %2, %4 : vector<16x128xf32>
    %cst_5 = arith.constant 0.000000e+00 : f32
    %6 = vector.broadcast %cst_5 : f32 to vector<16x128xf32>
    %7 = arith.maximumf %5, %6 : vector<16x128xf32>
    %c0_6 = arith.constant 0 : index
    %c0_7 = arith.constant 0 : index
    %8 = vector.load %arg4[%c0_6, %c0_7] : memref<4x16xf32, #tpu.memory_space<vmem>>, vector<4x16xf32>
    %cst_8 = arith.constant dense<0.000000e+00> : vector<4x128xf32>
    %9 = tpu.matmul %8, %7, %cst_8 {dimension_numbers = #tpu.dot_dimension_numbers<[1], [0], [0], [1], [0, 0, 1, 1], [], []>} : vector<4x16xf32>, vector<16x128xf32>, vector<4x128xf32> -> vector<4x128xf32>
    %c0_9 = arith.constant 0 : index
    %c0_10 = arith.constant 0 : index
    %10 = vector.load %arg5[%c0_9, %c0_10] : memref<4x1xf32, #tpu.memory_space<vmem>>, vector<4x1xf32>
    %11 = vector.broadcast %10 : vector<4x1xf32> to vector<4x128xf32>
    %12 = arith.addf %9, %11 : vector<4x128xf32>
    %cst_11 = arith.constant 0.000000e+00 : f32
    %13 = vector.broadcast %cst_11 : f32 to vector<4x128xf32>
    %14 = arith.maximumf %12, %13 : vector<4x128xf32>
    %c0_12 = arith.constant 0 : index
    %c0_13 = arith.constant 0 : index
    %15 = vector.load %arg6[%c0_12, %c0_13] : memref<4x1xf32, #tpu.memory_space<vmem>>, vector<4x1xf32>
    %16 = vector.broadcast %15 : vector<4x1xf32> to vector<4x128xf32>
    %17 = arith.mulf %14, %16 : vector<4x128xf32>
    %cst_14 = arith.constant dense<0.000000e+00> : vector<128xf32>
    %18 = vector.multi_reduction <add>, %17, %cst_14 [0] : vector<4x128xf32> to vector<128xf32>
    %19 = vector.shape_cast %18 : vector<128xf32> to vector<1x128xf32>
    %c0_15 = arith.constant 0 : index
    %c0_16 = arith.constant 0 : index
    %20 = vector.load %arg7[%c0_15, %c0_16] : memref<1x1xf32, #tpu.memory_space<vmem>>, vector<1x1xf32>
    %21 = vector.broadcast %20 : vector<1x1xf32> to vector<1x128xf32>
    %22 = arith.addf %19, %21 : vector<1x128xf32>
    %c0_17 = arith.constant 0 : index
    %c0_18 = arith.constant 0 : index
    %c0_19 = arith.constant 0 : index
    %23 = vector.load %arg8[%c0_17, %c0_18, %c0_19] : memref<1x1x128xf32, #tpu.memory_space<vmem>>, vector<1x1x128xf32>
    %24 = vector.shape_cast %23 : vector<1x1x128xf32> to vector<1x128xf32>
    %25 = vector.shape_cast %22 : vector<1x128xf32> to vector<1x1x128xf32>
    tpu.vector_store %arg8[%c0_17, %c0_18, %c0_19], %25 {strides = array<i32>} : memref<1x1x128xf32, #tpu.memory_space<vmem>>, vector<1x1x128xf32>,
    return
  }
  func.func @transform_0(%arg0: i32) -> (i32, i32) {
    %c0_i32 = arith.constant 0 : i32
    %c0_i32_0 = arith.constant 0 : i32
    return %arg0, %c0_i32 : i32, i32
  }
  func.func @transform_1(%arg0: i32) -> (i32, i32) {
    %c0_i32 = arith.constant 0 : i32
    %c0_i32_0 = arith.constant 0 : i32
    %c0_i32_1 = arith.constant 0 : i32
    return %c0_i32, %c0_i32_0 : i32, i32
  }
  func.func @transform_2(%arg0: i32) -> (i32, i32) {
    %c0_i32 = arith.constant 0 : i32
    %c0_i32_0 = arith.constant 0 : i32
    %c0_i32_1 = arith.constant 0 : i32
    return %c0_i32, %c0_i32_0 : i32, i32
  }
  func.func @transform_3(%arg0: i32) -> (i32, i32) {
    %c0_i32 = arith.constant 0 : i32
    %c0_i32_0 = arith.constant 0 : i32
    %c0_i32_1 = arith.constant 0 : i32
    return %c0_i32, %c0_i32_0 : i32, i32
  }
  func.func @transform_4(%arg0: i32) -> (i32, i32) {
    %c0_i32 = arith.constant 0 : i32
    %c0_i32_0 = arith.constant 0 : i32
    %c0_i32_1 = arith.constant 0 : i32
    return %c0_i32, %c0_i32_0 : i32, i32
  }
  func.func @transform_5(%arg0: i32) -> (i32, i32) {
    %c0_i32 = arith.constant 0 : i32
    %c0_i32_0 = arith.constant 0 : i32
    %c0_i32_1 = arith.constant 0 : i32
    return %c0_i32, %c0_i32_0 : i32, i32
  }
  func.func @transform_6(%arg0: i32) -> (i32, i32) {
    %c0_i32 = arith.constant 0 : i32
    %c0_i32_0 = arith.constant 0 : i32
    %c0_i32_1 = arith.constant 0 : i32
    return %c0_i32, %c0_i32_0 : i32, i32
  }
  func.func @transform_7(%arg0: i32) -> (i32, i32, i32) {
    %c0_i32 = arith.constant 0 : i32
    %c0_i32_0 = arith.constant 0 : i32
    %c0_i32_1 = arith.constant 0 : i32
    return %arg0, %c0_i32, %c0_i32_0 : i32, i32, i32
  }
}

</mosaic_0001>

<llo_original>
// kernel: tpu_custom_call.1
$region0: #{tpu_custom_call.1}
  #allocation0 [shape = 'u32[]', space=smem, size = 0x4, offset = 0x4, fixed_abs, tag = 'smem constant byte address 0x4 - core index']
  #allocation1 [shape = 'u32[72,128]{1,0:T(1,128)}', space=vmem, size = 0x9000, scoped, tag = 'internal scratch']
  #allocation2 [shape = 'f32[1,1]{1,0:T(1,128)S(1)}', space=vmem, size = 0x200, scoped, tag = 'scoped memory for tpu_custom_call.1']
  %s0 = inlined_call_operand.vmem [shape: f32[128,32], index: 0, kind: input, shape index: {}]
  %s1 = inlined_call_operand.vmem [shape: f32[16,32], index: 1, kind: input, shape index: {}]
  %s2 = inlined_call_operand.vmem [shape: f32[16,1], index: 2, kind: input, shape index: {}]
  %s3 = inlined_call_operand.vmem [shape: f32[4,16], index: 3, kind: input, shape index: {}]
  %s4 = inlined_call_operand.vmem [shape: f32[4,1], index: 4, kind: input, shape index: {}]
  %s5 = inlined_call_operand.vmem [shape: f32[4,1], index: 5, kind: input, shape index: {}]
  %s6 = inlined_call_operand.<no memory space> [shape: f32[1,1], index: 6, kind: input, shape index: {}]
  %s7 = inlined_call_operand.hbm [shape: f32[1,1,128], index: 7, kind: output, shape index: {}]
  %s8 = sld [smem:[#allocation0]]
  $region38: #{tpu_custom_call.1} parent=0
    _
  %s10 = ssub.s32 1, %s8
  %s11 = scalar_select 0, %s10, %s8
  %v12 = vstv %s6
  %13 = vst [vmem:[#allocation2] sm:$0x1] %v12
  $region1: #{tpu_custom_call.1} parent=0
    #allocation3 [shape = 'u8[512]{0}', space=vmem, size = 0x400, scoped, tag = 'output window, operand 0, single buffered']
    #allocation4 [shape = 's32[1]{0}', space=sflag, size = 0x4, scoped, tag = 'scoped memory for tpu_custom_call.1']
    %14 = vsyncpa [#allocation4], 0
    // Predicated region
    $region2: #{tpu_custom_call.1} parent=1 // pred_check
      _
    $region3: #{tpu_custom_call.1} parent=1 // pred_check_branch
      %16 = sbr.rel (0) target = $region5
    $region4: #{tpu_custom_call.1} parent=1 // pred_region
      _
    $region5: #{tpu_custom_call.1} parent=1 // pred_fallthru
      _
    // Predicated region
    $region6: #{tpu_custom_call.1} parent=1 // pred_check
      _
    $region7: #{tpu_custom_call.1} parent=1 // pred_check_branch
      %18 = sbr.rel (0) target = $region9
    $region8: #{tpu_custom_call.1} parent=1 // pred_region
      _
    $region9: #{tpu_custom_call.1} parent=1 // pred_fallthru
      _
    // Predicated region
    $region10: #{tpu_custom_call.1} parent=1 // pred_check
      _
    $region11: #{tpu_custom_call.1} parent=1 // pred_check_branch
      %20 = sbr.rel (0) target = $region13
    $region12: #{tpu_custom_call.1} parent=1 // pred_region
      _
    $region13: #{tpu_custom_call.1} parent=1 // pred_fallthru
      _
    // Predicated region
    $region14: #{tpu_custom_call.1} parent=1 // pred_check
      _
    $region15: #{tpu_custom_call.1} parent=1 // pred_check_branch
      %22 = sbr.rel (0) target = $region17
    $region16: #{tpu_custom_call.1} parent=1 // pred_region
      _
    $region17: #{tpu_custom_call.1} parent=1 // pred_fallthru
      _
    // Predicated region
    $region18: #{tpu_custom_call.1} parent=1 // pred_check
      _
    $region19: #{tpu_custom_call.1} parent=1 // pred_check_branch
      %24 = sbr.rel (0) target = $region21
    $region20: #{tpu_custom_call.1} parent=1 // pred_region
      _
    $region21: #{tpu_custom_call.1} parent=1 // pred_fallthru
      _
    // Predicated region
    $region22: #{tpu_custom_call.1} parent=1 // pred_check
      _
    $region23: #{tpu_custom_call.1} parent=1 // pred_check_branch
      %26 = sbr.rel (0) target = $region25
    $region24: #{tpu_custom_call.1} parent=1 // pred_region
      _
    $region25: #{tpu_custom_call.1} parent=1 // pred_fallthru
      _
    // Predicated region
    $region26: #{tpu_custom_call.1} parent=1 // pred_check
      _
    $region27: #{tpu_custom_call.1} parent=1 // pred_check_branch
      %28 = sbr.rel (0) target = $region29
    $region28: #{tpu_custom_call.1} parent=1 // pred_region
      _
    $region29: #{tpu_custom_call.1} parent=1 // pred_fallthru
      _
    %v29 = vld [vmem:[%s1] sm:$0xff]
    %v30 = vld [vmem:[%s1 + $0x8] sm:$0xff]
    %v31 = vld [vmem:[%s0] sm:$0xff]
    %v32 = vld [vmem:[%s0 + $0x8] sm:$0xff]
    %v33 = vld [vmem:[%s0 + $0x10] sm:$0xff]
    %v34 = vld [vmem:[%s0 + $0x18] sm:$0xff]
    %v35 = vld [vmem:[%s0 + $0x20] sm:$0xff]
    %v36 = vld [vmem:[%s0 + $0x28] sm:$0xff]
    %v37 = vld [vmem:[%s0 + $0x30] sm:$0xff]
    %v38 = vld [vmem:[%s0 + $0x38] sm:$0xff]
    %v39 = vld [vmem:[%s0 + $0x40] sm:$0xff]
    %v40 = vld [vmem:[%s0 + $0x48] sm:$0xff]
    %v41 = vld [vmem:[%s0 + $0x50] sm:$0xff]
    %v42 = vld [vmem:[%s0 + $0x58] sm:$0xff]
    %v43 = vld [vmem:[%s0 + $0x60] sm:$0xff]
    %v44 = vld [vmem:[%s0 + $0x68] sm:$0xff]
    %v45 = vld [vmem:[%s0 + $0x70] sm:$0xff]
    %v46 = vld [vmem:[%s0 + $0x78] sm:$0xff]
    %v47 = vld [vmem:[%s2] sm:$0xff]
    %v48 = vld [vmem:[%s2 + $0x8] sm:$0xff]
    %50 = vset.pattern.permute.xlu0 0
    %51 = vperm.xlu0 %50, %v47
    %v52 = vpop.permute.xlu0 %51
    %55 = vset.pattern.permute.xlu0 0
    %56 = vperm.xlu0 %55, %v48
    %v57 = vpop.permute.xlu0 %56
    %vm59 = vcmask 261120
    %v61 = vsel %vm59, %v29, 0
    %v64 = vsel %vm59, %v30, 0
    %v67 = vsel %vm59, %v31, 0
    %v70 = vsel %vm59, %v32, 0
    %v73 = vsel %vm59, %v33, 0
    %v76 = vsel %vm59, %v34, 0
    %v79 = vsel %vm59, %v35, 0
    %v82 = vsel %vm59, %v36, 0
    %v85 = vsel %vm59, %v37, 0
    %v88 = vsel %vm59, %v38, 0
    %v91 = vsel %vm59, %v39, 0
    %v94 = vsel %vm59, %v40, 0
    %v97 = vsel %vm59, %v41, 0
    %v100 = vsel %vm59, %v42, 0
    %v103 = vsel %vm59, %v43, 0
    %v106 = vsel %vm59, %v44, 0
    %v109 = vsel %vm59, %v45, 0
    %v112 = vsel %vm59, %v46, 0
    %114 = vmatpush.xpose.msra.mxu0 %v112
    %115 = vmatpush.xpose.msra.mxu0 %v109
    %116 = vmatpush.xpose.msra.mxu0 %v106
    %117 = vmatpush.xpose.msra.mxu0 %v103
    %118 = vmatpush.xpose.msra.mxu0 %v100
    %119 = vmatpush.xpose.msra.mxu0 %v97
    %120 = vmatpush.xpose.msra.mxu0 %v94
    %121 = vmatpush.xpose.msra.mxu0 %v91
    %122 = vmatpush.xpose.msra.mxu0 %v88
    %123 = vmatpush.xpose.msra.mxu0 %v85
    %124 = vmatpush.xpose.msra.mxu0 %v82
    %125 = vmatpush.xpose.msra.mxu0 %v79
    %126 = vmatpush.xpose.msra.mxu0 %v76
    %127 = vmatpush.xpose.msra.mxu0 %v73
    %128 = vmatpush.xpose.msra.mxu0 %v70
    %129 = vmatpush.xpose.msra.mxu0 %v67
    %130 = vmatmul.f32.gmra.mxu0 %v61
    %v131 = vpop.f32.mrf.mxu0
    %v132 = vadd.f32 %v52, %v131
    %133 = vmatmul.f32.gmra.mxu0 %v64
    %v134 = vpop.f32.mrf.mxu0
    %v135 = vadd.f32 %v57, %v134
    %136 = vdwg.mxu0
    %v137 = vmax.f32 %v132, 0.0
    %v138 = vmax.f32 %v135, 0.0
    %v139 = vld [vmem:[%s3] sm:$0xf]
    %v140 = vld [vmem:[%s4] sm:$0xf]
    %142 = vset.pattern.permute.xlu0 0
    %143 = vperm.xlu0 %142, %v140
    %v144 = vpop.permute.xlu0 %143
    %vm146 = vcmask 130048
    %v148 = vsel %vm146, %v139, 0
    %150 = vmatpush.msra.mxu0 0.0
    %151 = vmatpush.msra.mxu0 0.0
    %152 = vmatpush.msra.mxu0 0.0
    %153 = vmatpush.msra.mxu0 0.0
    %154 = vmatpush.msra.mxu0 0.0
    %155 = vmatpush.msra.mxu0 0.0
    %156 = vmatpush.msra.mxu0 0.0
    %157 = vmatpush.msra.mxu0 0.0
    %158 = vmatpush.msra.mxu0 0.0
    %159 = vmatpush.msra.mxu0 0.0
    %160 = vmatpush.msra.mxu0 0.0
    %161 = vmatpush.msra.mxu0 0.0
    %162 = vmatpush.msra.mxu0 0.0
    %163 = vmatpush.msra.mxu0 0.0
    %164 = vmatpush.msra.mxu0 %v138
    %165 = vmatpush.msra.mxu0 %v137
    %166 = vmatmul.f32.gmra.mxu0 %v148
    %v167 = vpop.f32.mrf.mxu0
    %v168 = vadd.f32 %v144, %v167
    %169 = vdwg.mxu0
    %v170 = vmax.f32 %v168, 0.0
    %v171 = vld [vmem:[%s5] sm:$0xf]
    %173 = vset.pattern.permute.xlu0 0
    %174 = vperm.xlu0 %173, %v171
    %v175 = vpop.permute.xlu0 %174
    %v177 = vmul.f32 %v170, %v175
    %vm178 = vcmask 1043456
    %v179 = vsel %vm178, %v177, 0.0
    %v180 = vrot.slane %v179, 4
    %v181 = vadd.f32 %v179, %v180
    %v182 = vrot.slane %v181, 2
    %v183 = vadd.f32 %v181, %v182
    %v184 = vrot.slane %v183, 1
    %v185 = vadd.f32 %v183, %v184
    %v186 = vld [vmem:[#allocation2] sm:$0x1]
    %188 = vset.pattern.permute.xlu0 0
    %189 = vperm.xlu0 %188, %v186
    %v190 = vpop.permute.xlu0 %189
    %v192 = vperm.slane %v190, 0
    %v193 = vadd.f32 %v185, %v192
    %194 = vst [vmem:[#allocation3] sm:$0x1] %v193
    // Predicated region
    $region30: #{tpu_custom_call.1} parent=1 // pred_check
      _
    $region31: #{tpu_custom_call.1} parent=1 // pred_check_branch
      %196 = sbr.rel (0) target = $region33
    $region32: #{tpu_custom_call.1} parent=1 // pred_region
      %198 = vsyncadd [#allocation4], 0
      %s200 = sshll.u32 [#allocation3], 4
      %s201 = int_to_ptr.vmem [resolvable:$true] %s200
      %s202 = sshll.u32 %s7, 4
      %s203 = int_to_ptr.hbm [resolvable:$true] %s202
      %205 = dma.vmem_to_hbm [thread:$0]  %s201, 16, %s203, [#allocation4]
    $region33: #{tpu_custom_call.1} parent=1 // pred_fallthru
      _
    // Predicated region
    $region34: #{tpu_custom_call.1} parent=1 // pred_check
      _
    $region35: #{tpu_custom_call.1} parent=1 // pred_check_branch
      %207 = sbr.rel (0) target = $region37
    $region36: #{tpu_custom_call.1} parent=1 // pred_region
      %209 = dma.done [#allocation4], 16
    $region37: #{tpu_custom_call.1} parent=1 // pred_fallthru
      _
    %210 = vsyncpa [#allocation4], 1

</llo_original>
